<compile_context>
chip_gen: v5e
topology: v5e:2x2
jax: 0.10.0
libtpu: 0.0.40
codegen_flags: <defaults>
</compile_context>

<pallas_src>
import math

import jax
import jax.numpy as jnp
from jax import lax
from jax.experimental import pallas as pl
from jax.experimental.pallas import tpu as pltpu


# ---------------- small config consistent with the module -------------------
N            = 2      # batch
NUM_CHANNELS = 4      # C  (EEG channels)
INPUT_SIZE   = 16     # T  (time samples)
NUM_CLASSES  = 8
NUM_FILTERS  = 8      # F
FILTER_WIDTH = 4      # fw (even -> padding = (P//2, P//2 + 1))
POOL_SIZE    = 4

# derived quantities (mirror the PyTorch __init__ / forward arithmetic)
P = INPUT_SIZE - 1 - INPUT_SIZE + (FILTER_WIDTH - 1)          # = fw - 2
if P % 2 == 0:
    PAD_L, PAD_R = P // 2, P // 2 + 1
else:
    PAD_L, PAD_R = P // 2, P // 2
T_PAD = INPUT_SIZE + PAD_L + PAD_R                            # conv input width
T_OUT = T_PAD - FILTER_WIDTH + 1                              # conv output width
WP    = (T_OUT + PAD_L + PAD_R) // POOL_SIZE                  # pooled width
CL_WY = int(math.ceil(float(INPUT_SIZE) / float(POOL_SIZE))) * NUM_FILTERS
assert CL_WY == NUM_FILTERS * WP, "config must keep cl_Wy consistent"
assert NUM_CLASSES == NUM_FILTERS, "keeps the 8-lane parameter slab layout simple"

# ----- parameter slab layout: one (SLAB_ROWS, 8) f32 array, 8 lanes wide -----
RCF       = FILTER_WIDTH * NUM_CHANNELS        # 16 rows per filter-bank tile
ROW_B     = 0
ROW_PHI   = ROW_B   + RCF
ROW_OM    = ROW_PHI + RCF
ROW_BE    = ROW_OM  + RCF
ROW_T     = ROW_BE  + RCF
ROW_CW    = ROW_T   + RCF                       # permuted classifier W, (WP*F, classes)
ROW_BIAS  = ROW_CW  + WP * NUM_FILTERS          # conv bias row
ROW_CLSB  = ROW_BIAS + 1                        # classifier bias row
SLAB_ROWS = ((ROW_CLSB + 1 + 7) // 8) * 8       # pad rows to a multiple of 8


def pack_syncnet_params(params):
    """One-time setup: permute/stack the raw (torch-shaped) parameters into a
    single (SLAB_ROWS, 8) f32 slab.  This is a pure relabelling -- the filter
    bank W is still computed *inside* the kernel from these raw values."""
    b, bias, omega, t, phi, beta, cls_w, cls_b = params
    b2   = jnp.asarray(b,     jnp.float32).reshape(NUM_CHANNELS, NUM_FILTERS)
    phi2 = jnp.asarray(phi,   jnp.float32).reshape(NUM_CHANNELS, NUM_FILTERS)
    om1  = jnp.asarray(omega, jnp.float32).reshape(NUM_FILTERS)
    be1  = jnp.asarray(beta,  jnp.float32).reshape(NUM_FILTERS)
    t1   = jnp.asarray(t,     jnp.float32).reshape(FILTER_WIDTH)

    # torch builds W with shape (1, fw, C, F) then reinterprets it row-major as
    # conv weight (F, C, 1, fw).  Bake that reinterpretation into index maps so
    # the kernel computes W directly in the stacked (row = k*C + c, col = f)
    # layout used by the single conv matmul.
    r     = jnp.arange(FILTER_WIDTH * NUM_CHANNELS)[:, None]     # row = k*C + c
    f     = jnp.arange(NUM_FILTERS)[None, :]                     # conv out channel
    k_tap = r // NUM_CHANNELS
    c_in  = r % NUM_CHANNELS
    flat  = f * (NUM_CHANNELS * FILTER_WIDTH) + c_in * FILTER_WIDTH + k_tap
    kp = flat // (NUM_CHANNELS * NUM_FILTERS)                    # index into t
    cp = (flat // NUM_FILTERS) % NUM_CHANNELS                    # index into b/phi
    fp = flat % NUM_FILTERS                                      # index into omega/beta
    B3, PHI3 = b2[cp, fp], phi2[cp, fp]                          # (16, 8) each
    OM3, BE3, T3 = om1[fp], be1[fp], t1[kp]                      # (16, 8) each

    # classifier weight permuted so feature (f*WP + j) becomes slab row (j*F + f)
    cw3 = jnp.asarray(cls_w, jnp.float32).reshape(NUM_CLASSES, NUM_FILTERS, WP)
    CWP = jnp.transpose(cw3, (2, 1, 0)).reshape(WP * NUM_FILTERS, NUM_CLASSES)

    bias_row = jnp.asarray(bias,  jnp.float32).reshape(1, NUM_FILTERS)
    clsb_row = jnp.asarray(cls_b, jnp.float32).reshape(1, NUM_CLASSES)
    pad = jnp.zeros((SLAB_ROWS - (ROW_CLSB + 1), NUM_FILTERS), jnp.float32)
    return jnp.concatenate(
        [B3, PHI3, OM3, BE3, T3, CWP, bias_row, clsb_row, pad], axis=0)


# ---------------- the single fused kernel -----------------------------------
def syncnet_fused_kernel(x_ref, slab_ref, o_ref, xs_ref):
    # ---- 1. oscillatory filter bank, directly in (fw*C, F) matmul layout ----
    # W3[k*C+c, f] = b*cos(t*omega + phi)*exp(-t^2*beta) at the permuted indices
    t3 = slab_ref[ROW_T:ROW_T + RCF, :]
    w3 = (slab_ref[ROW_B:ROW_B + RCF, :]
          * jnp.cos(t3 * slab_ref[ROW_OM:ROW_OM + RCF, :]
                    + slab_ref[ROW_PHI:ROW_PHI + RCF, :])
          * jnp.exp(-(t3 * t3) * slab_ref[ROW_BE:ROW_BE + RCF, :]))      # (16, 8)

    # ---- 2. stacked, zero-padded conv input in VMEM scratch ------------------
    # xs[n*T_OUT + t, k*C + c] = Xpadded[n, c, t + k]   (permute + pad done here)
    xs_ref[...] = jnp.zeros_like(xs_ref)
    for n in range(N):
        xn = x_ref[n]                                                    # (T, C)
        for k in range(FILTER_WIDTH):
            t_lo = max(0, PAD_L - k)
            t_hi = min(T_OUT, INPUT_SIZE + PAD_L - k)
            s_lo, s_hi = t_lo + k - PAD_L, t_hi + k - PAD_L
            xs_ref[n * T_OUT + t_lo:n * T_OUT + t_hi,
                   k * NUM_CHANNELS:(k + 1) * NUM_CHANNELS] = xn[s_lo:s_hi, :]

    # ---- 3. conv1d + bias for BOTH batch rows in one MXU matmul --------------
    acc = jnp.dot(xs_ref[...], w3, preferred_element_type=jnp.float32)   # (32, 8)
    acc = acc + slab_ref[ROW_BIAS:ROW_BIAS + 1, :]

    # ---- 4. zero-pad + maxpool + relu + classifier, all in registers ---------
    clsb = slab_ref[ROW_CLSB:ROW_CLSB + 1, :]                            # (1, 8)
    for n in range(N):
        logit = clsb
        for j in range(WP):
            # pool window j covers conv rows [j*POOL - PAD_L, j*POOL - PAD_L + POOL)
            lo = max(j * POOL_SIZE - PAD_L, 0)
            hi = min(j * POOL_SIZE - PAD_L + POOL_SIZE, T_OUT)
            m = jnp.max(acc[n * T_OUT + lo:n * T_OUT + hi, :],
                        axis=0, keepdims=True)                           # (1, F)
            m = jnp.maximum(m, 0.0)   # relu; also covers the zero-pad window slots
            logit = logit + jnp.dot(
                m,
                slab_ref[ROW_CW + j * NUM_FILTERS:
                         ROW_CW + (j + 1) * NUM_FILTERS, :],
                preferred_element_type=jnp.float32)                      # (1, classes)
        o_ref[n:n + 1, :] = logit


def syncnet_forward(x, slab):
    """x: (N, INPUT_SIZE, NUM_CHANNELS) f32, slab: pack_syncnet_params(...).
    Exactly one pallas_call, no grid, no XLA glue ops."""
    out = pl.pallas_call(
        syncnet_fused_kernel,
        out_shape=jax.ShapeDtypeStruct((N, NUM_CLASSES), jnp.float32),
        scratch_shapes=[pltpu.VMEM((N * T_OUT, RCF), jnp.float32)],
    )(x, slab)
    # TODO(synk): the module also re-wraps `self.beta = nn.Parameter(clamp(beta, 0))`
    # (training-time parameter mutation with no effect on the returned logits).
    return jnp.squeeze(out)               # .squeeze() is a no-op at (2, 8)


# ---------------- pure-JAX reference (mirrors the torch ops) ----------------
def reference_forward(x, params):
    b, bias, omega, t, phi, beta, cls_w, cls_b = params
    w_osc = b * jnp.cos(t * omega + phi)
    w_dec = jnp.exp(-(t ** 2) * beta)
    w = (w_osc * w_dec).reshape(NUM_FILTERS, NUM_CHANNELS, 1, FILTER_WIDTH)
    xp = jnp.transpose(x, (0, 2, 1))[:, :, None, :]
    xp = jnp.pad(xp, ((0, 0), (0, 0), (0, 0), (PAD_L, PAD_R)))
    conv = lax.conv_general_dilated(xp, w, (1, 1), 'VALID',
                                    dimension_numbers=('NCHW', 'OIHW', 'NCHW'))
    conv = conv + bias[None, :, None, None]
    convp = jnp.pad(conv, ((0, 0), (0, 0), (0, 0), (PAD_L, PAD_R)))
    wp = convp.shape[-1] // POOL_SIZE
    pooled = convp[..., :wp * POOL_SIZE].reshape(
        N, NUM_FILTERS, 1, wp, POOL_SIZE).max(-1)
    res = pooled.reshape(N, CL_WY)
    return jnp.squeeze(jnp.maximum(res, 0.0) @ cls_w.T + cls_b)


if __name__ == "__main__":
    key = jax.random.PRNGKey(0)
    ks = jax.random.split(key, 8)
    b_p     = jax.random.uniform(ks[0], (1, 1, NUM_CHANNELS, NUM_FILTERS),
                                 jnp.float32, -0.05, 0.05)
    # torch init fills bias with 0; use small random values so the bias path is
    # actually exercised by the check.
    bias_p  = jax.random.uniform(ks[1], (NUM_FILTERS,), jnp.float32, -0.1, 0.1)
    omega_p = jax.random.uniform(ks[2], (1, 1, 1, NUM_FILTERS), jnp.float32, 0.0, 1.0)
    # torch init fills `t` with zeros; use the symmetric tap indices so the
    # oscillatory / decay terms are exercised (deterministic either way).
    t_p     = jnp.arange(-FILTER_WIDTH // 2, FILTER_WIDTH // 2,
                         dtype=jnp.float32).reshape(1, FILTER_WIDTH, 1, 1)
    phi_p   = 0.05 * jax.random.normal(ks[3], (1, 1, NUM_CHANNELS, NUM_FILTERS),
                                       jnp.float32)
    beta_p  = jax.random.uniform(ks[4], (1, 1, 1, NUM_FILTERS), jnp.float32, 0.0, 0.05)
    cls_w   = jax.random.uniform(ks[5], (NUM_CLASSES, CL_WY), jnp.float32, -0.1, 0.1)
    cls_b   = jax.random.uniform(ks[6], (NUM_CLASSES,), jnp.float32, -0.1, 0.1)
    x       = jax.random.normal(ks[7], (N, INPUT_SIZE, NUM_CHANNELS), jnp.float32)

    params = (b_p, bias_p, omega_p, t_p, phi_p, beta_p, cls_w, cls_b)
    slab = pack_syncnet_params(params)     # one-time setup (pure relabelling)

    out = jax.block_until_ready(syncnet_forward(x, slab))
    ref = reference_forward(x, params)

    assert out.shape == (N, NUM_CLASSES), out.shape
    # tolerance covers MXU default-precision rounding differences between the
    # in-kernel dots and the XLA reference conv/matmul.
    assert jnp.allclose(out, ref, atol=1e-3, rtol=1e-3), (out, ref)
    print("KERNEL_OK")
</pallas_src>

<mosaic_0001>
module attributes {stable_mosaic.version = 11 : i64} {
  func.func @syncnet_fused_kernel(%arg0: memref<2x16x4xf32, #tpu.memory_space<vmem>>, %arg1: memref<120x8xf32, #tpu.memory_space<vmem>>, %arg2: memref<2x8xf32, #tpu.memory_space<vmem>>, %arg3: memref<32x16xf32, #tpu.memory_space<vmem>>) attributes {dimension_semantics = [], scalar_prefetch = 0 : i64, scratch_operands = 1 : i64, tpu.core_type = #tpu.core_type<tc>} {
    %c64 = arith.constant 64 : index
    %c0 = arith.constant 0 : index
    %0 = vector.load %arg1[%c64, %c0] : memref<120x8xf32, #tpu.memory_space<vmem>>, vector<16x8xf32>
    %c0_0 = arith.constant 0 : index
    %c0_1 = arith.constant 0 : index
    %1 = vector.load %arg1[%c0_0, %c0_1] : memref<120x8xf32, #tpu.memory_space<vmem>>, vector<16x8xf32>
    %c32 = arith.constant 32 : index
    %c0_2 = arith.constant 0 : index
    %2 = vector.load %arg1[%c32, %c0_2] : memref<120x8xf32, #tpu.memory_space<vmem>>, vector<16x8xf32>
    %3 = arith.mulf %0, %2 : vector<16x8xf32>
    %c16 = arith.constant 16 : index
    %c0_3 = arith.constant 0 : index
    %4 = vector.load %arg1[%c16, %c0_3] : memref<120x8xf32, #tpu.memory_space<vmem>>, vector<16x8xf32>
    %5 = arith.addf %3, %4 : vector<16x8xf32>
    %6 = math.cos %5 : vector<16x8xf32>
    %7 = arith.mulf %1, %6 : vector<16x8xf32>
    %8 = arith.mulf %0, %0 : vector<16x8xf32>
    %cst = arith.constant 0.000000e+00 : f32
    %9 = vector.broadcast %cst : f32 to vector<16x8xf32>
    %10 = arith.subf %9, %8 : vector<16x8xf32>
    %c48 = arith.constant 48 : index
    %c0_4 = arith.constant 0 : index
    %11 = vector.load %arg1[%c48, %c0_4] : memref<120x8xf32, #tpu.memory_space<vmem>>, vector<16x8xf32>
    %12 = arith.mulf %10, %11 : vector<16x8xf32>
    %13 = math.exp %12 : vector<16x8xf32>
    %14 = arith.mulf %7, %13 : vector<16x8xf32>
    %cst_5 = arith.constant 0.000000e+00 : f32
    %15 = vector.broadcast %cst_5 : f32 to vector<32x16xf32>
    %c0_6 = arith.constant 0 : index
    %c0_7 = arith.constant 0 : index
    %16 = vector.load %arg3[%c0_6, %c0_7] : memref<32x16xf32, #tpu.memory_space<vmem>>, vector<32x16xf32>
    tpu.vector_store %arg3[%c0_6, %c0_7], %15 {strides = array<i32>} : memref<32x16xf32, #tpu.memory_space<vmem>>, vector<32x16xf32>,
    %c0_8 = arith.constant 0 : index
    %c0_9 = arith.constant 0 : index
    %c0_10 = arith.constant 0 : index
    %17 = vector.load %arg0[%c0_8, %c0_9, %c0_10] : memref<2x16x4xf32, #tpu.memory_space<vmem>>, vector<1x16x4xf32>
    %18 = vector.shape_cast %17 : vector<1x16x4xf32> to vector<16x4xf32>
    %19 = vector.extract_strided_slice %18 {offsets = [0, 0], sizes = [15, 4], strides = [1, 1]} : vector<16x4xf32> to vector<15x4xf32>
    %c1 = arith.constant 1 : index
    %c0_11 = arith.constant 0 : index
    %20 = vector.load %arg3[%c1, %c0_11] : memref<32x16xf32, #tpu.memory_space<vmem>>, vector<15x4xf32>
    tpu.vector_store %arg3[%c1, %c0_11], %19 {strides = array<i32>} : memref<32x16xf32, #tpu.memory_space<vmem>>, vector<15x4xf32>,
    %c0_12 = arith.constant 0 : index
    %c4 = arith.constant 4 : index
    %21 = vector.load %arg3[%c0_12, %c4] : memref<32x16xf32, #tpu.memory_space<vmem>>, vector<16x4xf32>
    tpu.vector_store %arg3[%c0_12, %c4], %18 {strides = array<i32>} : memref<32x16xf32, #tpu.memory_space<vmem>>, vector<16x4xf32>,
    %22 = vector.extract_strided_slice %18 {offsets = [1, 0], sizes = [15, 4], strides = [1, 1]} : vector<16x4xf32> to vector<15x4xf32>
    %c0_13 = arith.constant 0 : index
    %c8 = arith.constant 8 : index
    %23 = vector.load %arg3[%c0_13, %c8] : memref<32x16xf32, #tpu.memory_space<vmem>>, vector<15x4xf32>
    tpu.vector_store %arg3[%c0_13, %c8], %22 {strides = array<i32>} : memref<32x16xf32, #tpu.memory_space<vmem>>, vector<15x4xf32>,
    %24 = vector.extract_strided_slice %18 {offsets = [2, 0], sizes = [14, 4], strides = [1, 1]} : vector<16x4xf32> to vector<14x4xf32>
    %c0_14 = arith.constant 0 : index
    %c12 = arith.constant 12 : index
    %25 = vector.load %arg3[%c0_14, %c12] : memref<32x16xf32, #tpu.memory_space<vmem>>, vector<14x4xf32>
    tpu.vector_store %arg3[%c0_14, %c12], %24 {strides = array<i32>} : memref<32x16xf32, #tpu.memory_space<vmem>>, vector<14x4xf32>,
    %c1_15 = arith.constant 1 : index
    %c0_16 = arith.constant 0 : index
    %c0_17 = arith.constant 0 : index
    %26 = vector.load %arg0[%c1_15, %c0_16, %c0_17] : memref<2x16x4xf32, #tpu.memory_space<vmem>>, vector<1x16x4xf32>
    %27 = vector.shape_cast %26 : vector<1x16x4xf32> to vector<16x4xf32>
    %28 = vector.extract_strided_slice %27 {offsets = [0, 0], sizes = [15, 4], strides = [1, 1]} : vector<16x4xf32> to vector<15x4xf32>
    %c17 = arith.constant 17 : index
    %c0_18 = arith.constant 0 : index
    %29 = vector.load %arg3[%c17, %c0_18] : memref<32x16xf32, #tpu.memory_space<vmem>>, vector<15x4xf32>
    tpu.vector_store %arg3[%c17, %c0_18], %28 {strides = array<i32>} : memref<32x16xf32, #tpu.memory_space<vmem>>, vector<15x4xf32>,
    %c16_19 = arith.constant 16 : index
    %c4_20 = arith.constant 4 : index
    %30 = vector.load %arg3[%c16_19, %c4_20] : memref<32x16xf32, #tpu.memory_space<vmem>>, vector<16x4xf32>
    tpu.vector_store %arg3[%c16_19, %c4_20], %27 {strides = array<i32>} : memref<32x16xf32, #tpu.memory_space<vmem>>, vector<16x4xf32>,
    %31 = vector.extract_strided_slice %27 {offsets = [1, 0], sizes = [15, 4], strides = [1, 1]} : vector<16x4xf32> to vector<15x4xf32>
    %c16_21 = arith.constant 16 : index
    %c8_22 = arith.constant 8 : index
    %32 = vector.load %arg3[%c16_21, %c8_22] : memref<32x16xf32, #tpu.memory_space<vmem>>, vector<15x4xf32>
    tpu.vector_store %arg3[%c16_21, %c8_22], %31 {strides = array<i32>} : memref<32x16xf32, #tpu.memory_space<vmem>>, vector<15x4xf32>,
    %33 = vector.extract_strided_slice %27 {offsets = [2, 0], sizes = [14, 4], strides = [1, 1]} : vector<16x4xf32> to vector<14x4xf32>
    %c16_23 = arith.constant 16 : index
    %c12_24 = arith.constant 12 : index
    %34 = vector.load %arg3[%c16_23, %c12_24] : memref<32x16xf32, #tpu.memory_space<vmem>>, vector<14x4xf32>
    tpu.vector_store %arg3[%c16_23, %c12_24], %33 {strides = array<i32>} : memref<32x16xf32, #tpu.memory_space<vmem>>, vector<14x4xf32>,
    %c0_25 = arith.constant 0 : index
    %c0_26 = arith.constant 0 : index
    %35 = vector.load %arg3[%c0_25, %c0_26] : memref<32x16xf32, #tpu.memory_space<vmem>>, vector<32x16xf32>
    %cst_27 = arith.constant dense<0.000000e+00> : vector<32x8xf32>
    %36 = tpu.matmul %35, %14, %cst_27 {dimension_numbers = #tpu.dot_dimension_numbers<[1], [0], [0], [1], [0, 0, 1, 1], [], []>} : vector<32x16xf32>, vector<16x8xf32>, vector<32x8xf32> -> vector<32x8xf32>
    %c112 = arith.constant 112 : index
    %c0_28 = arith.constant 0 : index
    %37 = vector.load %arg1[%c112, %c0_28] : memref<120x8xf32, #tpu.memory_space<vmem>>, vector<1x8xf32>
    %38 = vector.broadcast %37 : vector<1x8xf32> to vector<32x8xf32>
    %39 = arith.addf %36, %38 : vector<32x8xf32>
    %c113 = arith.constant 113 : index
    %c0_29 = arith.constant 0 : index
    %40 = vector.load %arg1[%c113, %c0_29] : memref<120x8xf32, #tpu.memory_space<vmem>>, vector<1x8xf32>
    %41 = vector.extract_strided_slice %39 {offsets = [0, 0], sizes = [3, 8], strides = [1, 1]} : vector<32x8xf32> to vector<3x8xf32>
    %cst_30 = arith.constant dense<0xFF800000> : vector<8xf32>
    %42 = vector.multi_reduction <maximumf>, %41, %cst_30 [0] : vector<3x8xf32> to vector<8xf32>
    %43 = vector.shape_cast %42 : vector<8xf32> to vector<1x8xf32>
    %cst_31 = arith.constant 0.000000e+00 : f32
    %44 = vector.broadcast %cst_31 : f32 to vector<1x8xf32>
    %45 = arith.maximumf %43, %44 : vector<1x8xf32>
    %c80 = arith.constant 80 : index
    %c0_32 = arith.constant 0 : index
    %46 = vector.load %arg1[%c80, %c0_32] : memref<120x8xf32, #tpu.memory_space<vmem>>, vector<8x8xf32>
    %cst_33 = arith.constant dense<0.000000e+00> : vector<1x8xf32>
    %47 = tpu.matmul %45, %46, %cst_33 {dimension_numbers = #tpu.dot_dimension_numbers<[1], [0], [0], [1], [0, 0, 1, 1], [], []>} : vector<1x8xf32>, vector<8x8xf32>, vector<1x8xf32> -> vector<1x8xf32>
    %48 = arith.addf %40, %47 : vector<1x8xf32>
    %49 = vector.extract_strided_slice %39 {offsets = [3, 0], sizes = [4, 8], strides = [1, 1]} : vector<32x8xf32> to vector<4x8xf32>
    %cst_34 = arith.constant dense<0xFF800000> : vector<8xf32>
    %50 = vector.multi_reduction <maximumf>, %49, %cst_34 [0] : vector<4x8xf32> to vector<8xf32>
    %51 = vector.shape_cast %50 : vector<8xf32> to vector<1x8xf32>
    %cst_35 = arith.constant 0.000000e+00 : f32
    %52 = vector.broadcast %cst_35 : f32 to vector<1x8xf32>
    %53 = arith.maximumf %51, %52 : vector<1x8xf32>
    %c88 = arith.constant 88 : index
    %c0_36 = arith.constant 0 : index
    %54 = vector.load %arg1[%c88, %c0_36] : memref<120x8xf32, #tpu.memory_space<vmem>>, vector<8x8xf32>
    %cst_37 = arith.constant dense<0.000000e+00> : vector<1x8xf32>
    %55 = tpu.matmul %53, %54, %cst_37 {dimension_numbers = #tpu.dot_dimension_numbers<[1], [0], [0], [1], [0, 0, 1, 1], [], []>} : vector<1x8xf32>, vector<8x8xf32>, vector<1x8xf32> -> vector<1x8xf32>
    %56 = arith.addf %48, %55 : vector<1x8xf32>
    %57 = vector.extract_strided_slice %39 {offsets = [7, 0], sizes = [4, 8], strides = [1, 1]} : vector<32x8xf32> to vector<4x8xf32>
    %cst_38 = arith.constant dense<0xFF800000> : vector<8xf32>
    %58 = vector.multi_reduction <maximumf>, %57, %cst_38 [0] : vector<4x8xf32> to vector<8xf32>
    %59 = vector.shape_cast %58 : vector<8xf32> to vector<1x8xf32>
    %cst_39 = arith.constant 0.000000e+00 : f32
    %60 = vector.broadcast %cst_39 : f32 to vector<1x8xf32>
    %61 = arith.maximumf %59, %60 : vector<1x8xf32>
    %c96 = arith.constant 96 : index
    %c0_40 = arith.constant 0 : index
    %62 = vector.load %arg1[%c96, %c0_40] : memref<120x8xf32, #tpu.memory_space<vmem>>, vector<8x8xf32>
    %cst_41 = arith.constant dense<0.000000e+00> : vector<1x8xf32>
    %63 = tpu.matmul %61, %62, %cst_41 {dimension_numbers = #tpu.dot_dimension_numbers<[1], [0], [0], [1], [0, 0, 1, 1], [], []>} : vector<1x8xf32>, vector<8x8xf32>, vector<1x8xf32> -> vector<1x8xf32>
    %64 = arith.addf %56, %63 : vector<1x8xf32>
    %65 = vector.extract_strided_slice %39 {offsets = [11, 0], sizes = [4, 8], strides = [1, 1]} : vector<32x8xf32> to vector<4x8xf32>
    %cst_42 = arith.constant dense<0xFF800000> : vector<8xf32>
    %66 = vector.multi_reduction <maximumf>, %65, %cst_42 [0] : vector<4x8xf32> to vector<8xf32>
    %67 = vector.shape_cast %66 : vector<8xf32> to vector<1x8xf32>
    %cst_43 = arith.constant 0.000000e+00 : f32
    %68 = vector.broadcast %cst_43 : f32 to vector<1x8xf32>
    %69 = arith.maximumf %67, %68 : vector<1x8xf32>
    %c104 = arith.constant 104 : index
    %c0_44 = arith.constant 0 : index
    %70 = vector.load %arg1[%c104, %c0_44] : memref<120x8xf32, #tpu.memory_space<vmem>>, vector<8x8xf32>
    %cst_45 = arith.constant dense<0.000000e+00> : vector<1x8xf32>
    %71 = tpu.matmul %69, %70, %cst_45 {dimension_numbers = #tpu.dot_dimension_numbers<[1], [0], [0], [1], [0, 0, 1, 1], [], []>} : vector<1x8xf32>, vector<8x8xf32>, vector<1x8xf32> -> vector<1x8xf32>
    %72 = arith.addf %64, %71 : vector<1x8xf32>
    %c0_46 = arith.constant 0 : index
    %c0_47 = arith.constant 0 : index
    %73 = vector.load %arg2[%c0_46, %c0_47] : memref<2x8xf32, #tpu.memory_space<vmem>>, vector<1x8xf32>
    tpu.vector_store %arg2[%c0_46, %c0_47], %72 {strides = array<i32>} : memref<2x8xf32, #tpu.memory_space<vmem>>, vector<1x8xf32>,
    %74 = vector.extract_strided_slice %39 {offsets = [16, 0], sizes = [3, 8], strides = [1, 1]} : vector<32x8xf32> to vector<3x8xf32>
    %cst_48 = arith.constant dense<0xFF800000> : vector<8xf32>
    %75 = vector.multi_reduction <maximumf>, %74, %cst_48 [0] : vector<3x8xf32> to vector<8xf32>
    %76 = vector.shape_cast %75 : vector<8xf32> to vector<1x8xf32>
    %cst_49 = arith.constant 0.000000e+00 : f32
    %77 = vector.broadcast %cst_49 : f32 to vector<1x8xf32>
    %78 = arith.maximumf %76, %77 : vector<1x8xf32>
    %c80_50 = arith.constant 80 : index
    %c0_51 = arith.constant 0 : index
    %79 = vector.load %arg1[%c80_50, %c0_51] : memref<120x8xf32, #tpu.memory_space<vmem>>, vector<8x8xf32>
    %cst_52 = arith.constant dense<0.000000e+00> : vector<1x8xf32>
    %80 = tpu.matmul %78, %79, %cst_52 {dimension_numbers = #tpu.dot_dimension_numbers<[1], [0], [0], [1], [0, 0, 1, 1], [], []>} : vector<1x8xf32>, vector<8x8xf32>, vector<1x8xf32> -> vector<1x8xf32>
    %81 = arith.addf %40, %80 : vector<1x8xf32>
    %82 = vector.extract_strided_slice %39 {offsets = [19, 0], sizes = [4, 8], strides = [1, 1]} : vector<32x8xf32> to vector<4x8xf32>
    %cst_53 = arith.constant dense<0xFF800000> : vector<8xf32>
    %83 = vector.multi_reduction <maximumf>, %82, %cst_53 [0] : vector<4x8xf32> to vector<8xf32>
    %84 = vector.shape_cast %83 : vector<8xf32> to vector<1x8xf32>
    %cst_54 = arith.constant 0.000000e+00 : f32
    %85 = vector.broadcast %cst_54 : f32 to vector<1x8xf32>
    %86 = arith.maximumf %84, %85 : vector<1x8xf32>
    %c88_55 = arith.constant 88 : index
    %c0_56 = arith.constant 0 : index
    %87 = vector.load %arg1[%c88_55, %c0_56] : memref<120x8xf32, #tpu.memory_space<vmem>>, vector<8x8xf32>
    %cst_57 = arith.constant dense<0.000000e+00> : vector<1x8xf32>
    %88 = tpu.matmul %86, %87, %cst_57 {dimension_numbers = #tpu.dot_dimension_numbers<[1], [0], [0], [1], [0, 0, 1, 1], [], []>} : vector<1x8xf32>, vector<8x8xf32>, vector<1x8xf32> -> vector<1x8xf32>
    %89 = arith.addf %81, %88 : vector<1x8xf32>
    %90 = vector.extract_strided_slice %39 {offsets = [23, 0], sizes = [4, 8], strides = [1, 1]} : vector<32x8xf32> to vector<4x8xf32>
    %cst_58 = arith.constant dense<0xFF800000> : vector<8xf32>
    %91 = vector.multi_reduction <maximumf>, %90, %cst_58 [0] : vector<4x8xf32> to vector<8xf32>
    %92 = vector.shape_cast %91 : vector<8xf32> to vector<1x8xf32>
    %cst_59 = arith.constant 0.000000e+00 : f32
    %93 = vector.broadcast %cst_59 : f32 to vector<1x8xf32>
    %94 = arith.maximumf %92, %93 : vector<1x8xf32>
    %c96_60 = arith.constant 96 : index
    %c0_61 = arith.constant 0 : index
    %95 = vector.load %arg1[%c96_60, %c0_61] : memref<120x8xf32, #tpu.memory_space<vmem>>, vector<8x8xf32>
    %cst_62 = arith.constant dense<0.000000e+00> : vector<1x8xf32>
    %96 = tpu.matmul %94, %95, %cst_62 {dimension_numbers = #tpu.dot_dimension_numbers<[1], [0], [0], [1], [0, 0, 1, 1], [], []>} : vector<1x8xf32>, vector<8x8xf32>, vector<1x8xf32> -> vector<1x8xf32>
    %97 = arith.addf %89, %96 : vector<1x8xf32>
    %98 = vector.extract_strided_slice %39 {offsets = [27, 0], sizes = [4, 8], strides = [1, 1]} : vector<32x8xf32> to vector<4x8xf32>
    %cst_63 = arith.constant dense<0xFF800000> : vector<8xf32>
    %99 = vector.multi_reduction <maximumf>, %98, %cst_63 [0] : vector<4x8xf32> to vector<8xf32>
    %100 = vector.shape_cast %99 : vector<8xf32> to vector<1x8xf32>
    %cst_64 = arith.constant 0.000000e+00 : f32
    %101 = vector.broadcast %cst_64 : f32 to vector<1x8xf32>
    %102 = arith.maximumf %100, %101 : vector<1x8xf32>
    %c104_65 = arith.constant 104 : index
    %c0_66 = arith.constant 0 : index
    %103 = vector.load %arg1[%c104_65, %c0_66] : memref<120x8xf32, #tpu.memory_space<vmem>>, vector<8x8xf32>
    %cst_67 = arith.constant dense<0.000000e+00> : vector<1x8xf32>
    %104 = tpu.matmul %102, %103, %cst_67 {dimension_numbers = #tpu.dot_dimension_numbers<[1], [0], [0], [1], [0, 0, 1, 1], [], []>} : vector<1x8xf32>, vector<8x8xf32>, vector<1x8xf32> -> vector<1x8xf32>
    %105 = arith.addf %97, %104 : vector<1x8xf32>
    %c1_68 = arith.constant 1 : index
    %c0_69 = arith.constant 0 : index
    %106 = vector.load %arg2[%c1_68, %c0_69] : memref<2x8xf32, #tpu.memory_space<vmem>>, vector<1x8xf32>
    tpu.vector_store %arg2[%c1_68, %c0_69], %105 {strides = array<i32>} : memref<2x8xf32, #tpu.memory_space<vmem>>, vector<1x8xf32>,
    return
  }
}

</mosaic_0001>

<llo_original>
// kernel: tpu_custom_call.1
$region0: #{tpu_custom_call.1}
  #allocation0 [shape = 'u32[]', space=smem, size = 0x4, offset = 0x4, fixed_abs, tag = 'smem constant byte address 0x4 - core index']
  #allocation1 [shape = 'u32[72,128]{1,0:T(1,128)}', space=vmem, size = 0x9000, scoped, tag = 'internal scratch']
  #allocation2 [shape = 'f32[32,16]{1,0:T(8,128)}', space=vmem, size = 0x4000, scoped, tag = 'scratch operand']
  %s0 = inlined_call_operand.vmem [shape: f32[2,16,4], index: 0, kind: input, shape index: {}]
  %s1 = inlined_call_operand.vmem [shape: f32[120,8], index: 1, kind: input, shape index: {}]
  %s2 = inlined_call_operand.hbm [shape: f32[2,8], index: 2, kind: output, shape index: {}]
  %s3 = sld [smem:[#allocation0]]
  $region18: #{tpu_custom_call.1} parent=0
    _
  %s5 = ssub.s32 1, %s3
  %s6 = scalar_select 0, %s5, %s3
  $region1: #{tpu_custom_call.1} parent=0
    #allocation3 [shape = 'u8[1024]{0}', space=vmem, size = 0x400, scoped, tag = 'output window, operand 0, single buffered']
    #allocation4 [shape = 's32[1]{0}', space=sflag, size = 0x4, scoped, tag = 'scoped memory for tpu_custom_call.1']
    %7 = vsyncpa [#allocation4], 0
    // Predicated region
    $region2: #{tpu_custom_call.1} parent=1 // pred_check
      _
    $region3: #{tpu_custom_call.1} parent=1 // pred_check_branch
      %9 = sbr.rel (0) target = $region5
    $region4: #{tpu_custom_call.1} parent=1 // pred_region
      _
    $region5: #{tpu_custom_call.1} parent=1 // pred_fallthru
      _
    // Predicated region
    $region6: #{tpu_custom_call.1} parent=1 // pred_check
      _
    $region7: #{tpu_custom_call.1} parent=1 // pred_check_branch
      %11 = sbr.rel (0) target = $region9
    $region8: #{tpu_custom_call.1} parent=1 // pred_region
      _
    $region9: #{tpu_custom_call.1} parent=1 // pred_fallthru
      _
    %v12 = vld [vmem:[%s1 + $0x40] sm:$0xff]
    %v13 = vld [vmem:[%s1 + $0x48] sm:$0xff]
    %v14 = vld [vmem:[%s1] sm:$0xff]
    %v15 = vld [vmem:[%s1 + $0x8] sm:$0xff]
    %v16 = vld [vmem:[%s1 + $0x20] sm:$0xff]
    %v17 = vld [vmem:[%s1 + $0x28] sm:$0xff]
    %v18 = vmul.f32 %v12, %v16
    %v19 = vmul.f32 %v13, %v17
    %v20 = vld [vmem:[%s1 + $0x10] sm:$0xff]
    %v21 = vld [vmem:[%s1 + $0x18] sm:$0xff]
    %v22 = vadd.f32 %v18, %v20
    %v23 = vadd.f32 %v19, %v21
    %v24 = vand.u32 2147483647, %v22
    %vm25 = vcmp.le.f32.partialorder %v24, 0.7853982
    %vm26 = vcmp.lt.s32.totalorder %v22, 0
    %v27 = vand.u32 %v22, 2139095040
    %v28 = vshrl.u32 %v27, 23
    %v29 = vsub.s32 %v28, 127
    %v30 = vand.u32 2147483647, %v22
    %v31 = vand.u32 %v30, 8388607
    %v32 = vor.u32 %v31, 8388608
    %v33 = vsub.s32 0, %v32
    %v34 = vadd.s32 %v29, 1
    %vm35 = vcmp.gt.s32.totalorder %v34, 0
    %v36 = vsel %vm35, %v34, 0
    %v37 = vshrl.u32 %v36, 5
    %v38 = vand.u32 %v36, 31
    %v39 = vsub.s32 32, %v38
    %v40 = vshrl.u32 683565275, %v39
    %v41 = vshll.u32 683565275, %v38
    %v42 = vshrl.u32 2475754826, %v39
    %v43 = vor.u32 %v41, %v42
    %v44 = vshll.u32 2475754826, %v38
    %v45 = vshrl.u32 2131351028, %v39
    %v46 = vor.u32 %v44, %v45
    %v47 = vshll.u32 2131351028, %v38
    %v48 = vshrl.u32 2102212464, %v39
    %v49 = vor.u32 %v47, %v48
    %v50 = vshll.u32 2102212464, %v38
    %v51 = vshrl.u32 920167782, %v39
    %v52 = vor.u32 %v50, %v51
    %v53 = vshll.u32 920167782, %v38
    %v54 = vshrl.u32 1326507024, %v39
    %v55 = vor.u32 %v53, %v54
    %vm56 = vcmp.lt.s32.totalorder %v37, 1
    %vm57 = vcmp.lt.s32.totalorder %v37, 2
    %vm58 = vcmp.lt.s32.totalorder %v37, 3
    %vm59 = vcmp.lt.s32.totalorder %v37, 4
    %v60 = vsel %vm56, %v40, %v43
    %v61 = vsel %vm59, %v49, 2102212464
    %v62 = vsel %vm58, %v46, %v61
    %v63 = vsel %vm57, %v60, %v62
    %v64 = vsel %vm56, %v43, %v46
    %v65 = vsel %vm59, %v52, 920167782
    %v66 = vsel %vm58, %v49, %v65
    %v67 = vsel %vm57, %v64, %v66
    %v68 = vsel %vm56, %v46, %v49
    %v69 = vsel %vm59, %v55, 1326507024
    %v70 = vsel %vm58, %v52, %v69
    %v71 = vsel %vm57, %v68, %v70
    %v72 = vshll.u32 %v32, 8
    %v73 = vand.u32 %v72, 65535
    %v74 = vshrl.u32 %v72, 16
    %v75 = vand.u32 %v71, 65535
    %v76 = vshrl.u32 %v71, 16
    %v77 = vmul.u32 %v73, %v75
    %v78 = vmul.u32 %v73, %v76
    %v79 = vmul.u32 %v74, %v75
    %v80 = vmul.u32 %v74, %v76
    %v81 = vshll.u32 %v78, 16
    %v82 = vshrl.u32 %v78, 16
    %v83 = vshll.u32 %v79, 16
    %v84 = vshrl.u32 %v79, 16
    %vm85 = vc.u32 %v77, %v81
    %v86 = vsel %vm85, 1, 0
    %v87 = vadd.s32 %v77, %v81
    %v88 = vadd.s32 %v80, %v86
    %vm89 = vc.u32 %v87, %v83
    %v90 = vsel %vm89, 1, 0
    %v91 = vadd.s32 %v87, %v83
    %v92 = vadd.s32 %v88, %v90
    %v93 = vadd.s32 %v92, %v82
    %v94 = vadd.s32 %v93, %v84
    %v95 = vand.u32 %v72, 65535
    %v96 = vshrl.u32 %v72, 16
    %v97 = vand.u32 %v67, 65535
    %v98 = vshrl.u32 %v67, 16
    %v99 = vmul.u32 %v95, %v97
    %v100 = vmul.u32 %v95, %v98
    %v101 = vmul.u32 %v96, %v97
    %v102 = vmul.u32 %v96, %v98
    %v103 = vshll.u32 %v100, 16
    %v104 = vshrl.u32 %v100, 16
    %v105 = vshll.u32 %v101, 16
    %v106 = vshrl.u32 %v101, 16
    %vm107 = vc.u32 %v99, %v103
    %v108 = vsel %vm107, 1, 0
    %v109 = vadd.s32 %v99, %v103
    %v110 = vadd.s32 %v102, %v108
    %vm111 = vc.u32 %v109, %v105
    %v112 = vsel %vm111, 1, 0
    %v113 = vadd.s32 %v109, %v105
    %v114 = vadd.s32 %v110, %v112
    %v115 = vadd.s32 %v114, %v104
    %v116 = vadd.s32 %v115, %v106
    %v117 = vmul.u32 %v72, %v63
    %v118 = vadd.s32 %v94, %v113
    %vm119 = vc.u32 %v94, %v113
    %v120 = vadd.s32 %v116, 1
    %v121 = vsel %vm119, %v120, %v116
    %v122 = vadd.s32 %v117, %v121
    %v123 = vadd.s32 %v122, 536870912
    %v124 = vshrl.u32 %v123, 30
    %v125 = vshll.u32 %v124, 30
    %v126 = vsub.s32 %v122, %v125
    %vm127 = vcmp.lt.s32.totalorder %v126, 0
    %v128 = vsub.s32 0, %v126
    %v129 = vsel %vm127, %v128, %v126
    %v130 = vclz %v129
    %v131 = vsub.s32 %v130, 2
    %vm132 = vcmp.gt.s32.totalorder 0, %v131
    %v133 = vsel %vm132, 0, %v131
    %v134 = vsub.s32 32, %v133
    %v135 = vshll.u32 %v126, %v133
    %v136 = vshrl.u32 %v118, %v134
    %v137 = vor.u32 %v135, %v136
    %v138 = vsub.s32 4294967266, %v133
    %v139 = vadd.s32 %v138, 127
    %v140 = vshll.u32 %v139, 23
    %v141 = vor.u32 4788187, %v140
    %v142 = vand.u32 2147483647, %v141
    %v144 = vcvt.s32.f32 %v137
    %v145 = vmul.f32 %v144, %v142
    %v146 = vxor.u32 %v145, 2147483648
    %v147 = vsel %vm26, %v146, %v145
    %v148 = vsub.s32 4, %v124
    %v149 = vsel %vm26, %v148, %v124
    %v150 = vsel %vm25, %v22, %v147
    %v151 = vsel %vm25, 0, %v149
    %v152 = vmul.f32 %v150, %v150
    %v153 = vmul.f32 %v152, -0.001358992
    %v154 = vadd.f32 %v153, 0.041655596
    %v155 = vmul.f32 %v152, %v154
    %v156 = vadd.f32 %v155, -0.4999988
    %v157 = vmul.f32 %v152, %v156
    %v158 = vadd.f32 1.0, %v157
    %v159 = vmul.f32 %v150, %v150
    %v160 = vmul.f32 %v159, -0.00019511016
    %v161 = vadd.f32 %v160, 0.008332121
    %v162 = vmul.f32 %v159, %v161
    %v163 = vadd.f32 %v162, -0.16666654
    %v164 = vmul.f32 %v159, %v163
    %v165 = vadd.f32 %v164, 1.0
    %v166 = vmul.f32 %v165, %v150
    %vm167 = vweird.f32 %v22
    %v168 = vand.u32 %v151, 3
    %vm169 = vcmp.lt.s32.totalorder %v168, 2
    %vm170 = vcmp.eq.s32.totalorder %v168, 0
    %v171 = vxor.u32 %v166, 2147483648
    %v172 = vsel %vm170, %v158, %v171
    %vm173 = vcmp.eq.s32.totalorder %v168, 2
    %v174 = vxor.u32 %v158, 2147483648
    %v175 = vsel %vm173, %v174, %v166
    %v176 = vsel %vm169, %v172, %v175
    %v177 = vsel %vm167, nan, %v176
    %v178 = vand.u32 2147483647, %v23
    %vm179 = vcmp.le.f32.partialorder %v178, 0.7853982
    %vm180 = vcmp.lt.s32.totalorder %v23, 0
    %v181 = vand.u32 %v23, 2139095040
    %v182 = vshrl.u32 %v181, 23
    %v183 = vsub.s32 %v182, 127
    %v184 = vand.u32 2147483647, %v23
    %v185 = vand.u32 %v184, 8388607
    %v186 = vor.u32 %v185, 8388608
    %v187 = vsub.s32 0, %v186
    %v188 = vadd.s32 %v183, 1
    %vm189 = vcmp.gt.s32.totalorder %v188, 0
    %v190 = vsel %vm189, %v188, 0
    %v191 = vshrl.u32 %v190, 5
    %v192 = vand.u32 %v190, 31
    %v193 = vsub.s32 32, %v192
    %v194 = vshrl.u32 683565275, %v193
    %v195 = vshll.u32 683565275, %v192
    %v196 = vshrl.u32 2475754826, %v193
    %v197 = vor.u32 %v195, %v196
    %v198 = vshll.u32 2475754826, %v192
    %v199 = vshrl.u32 2131351028, %v193
    %v200 = vor.u32 %v198, %v199
    %v201 = vshll.u32 2131351028, %v192
    %v202 = vshrl.u32 2102212464, %v193
    %v203 = vor.u32 %v201, %v202
    %v204 = vshll.u32 2102212464, %v192
    %v205 = vshrl.u32 920167782, %v193
    %v206 = vor.u32 %v204, %v205
    %v207 = vshll.u32 920167782, %v192
    %v208 = vshrl.u32 1326507024, %v193
    %v209 = vor.u32 %v207, %v208
    %vm210 = vcmp.lt.s32.totalorder %v191, 1
    %vm211 = vcmp.lt.s32.totalorder %v191, 2
    %vm212 = vcmp.lt.s32.totalorder %v191, 3
    %vm213 = vcmp.lt.s32.totalorder %v191, 4
    %v214 = vsel %vm210, %v194, %v197
    %v215 = vsel %vm213, %v203, 2102212464
    %v216 = vsel %vm212, %v200, %v215
    %v217 = vsel %vm211, %v214, %v216
    %v218 = vsel %vm210, %v197, %v200
    %v219 = vsel %vm213, %v206, 920167782
    %v220 = vsel %vm212, %v203, %v219
    %v221 = vsel %vm211, %v218, %v220
    %v222 = vsel %vm210, %v200, %v203
    %v223 = vsel %vm213, %v209, 1326507024
    %v224 = vsel %vm212, %v206, %v223
    %v225 = vsel %vm211, %v222, %v224
    %v226 = vshll.u32 %v186, 8
    %v227 = vand.u32 %v226, 65535
    %v228 = vshrl.u32 %v226, 16
    %v229 = vand.u32 %v225, 65535
    %v230 = vshrl.u32 %v225, 16
    %v231 = vmul.u32 %v227, %v229
    %v232 = vmul.u32 %v227, %v230
    %v233 = vmul.u32 %v228, %v229
    %v234 = vmul.u32 %v228, %v230
    %v235 = vshll.u32 %v232, 16
    %v236 = vshrl.u32 %v232, 16
    %v237 = vshll.u32 %v233, 16
    %v238 = vshrl.u32 %v233, 16
    %vm239 = vc.u32 %v231, %v235
    %v240 = vsel %vm239, 1, 0
    %v241 = vadd.s32 %v231, %v235
    %v242 = vadd.s32 %v234, %v240
    %vm243 = vc.u32 %v241, %v237
    %v244 = vsel %vm243, 1, 0
    %v245 = vadd.s32 %v241, %v237
    %v246 = vadd.s32 %v242, %v244
    %v247 = vadd.s32 %v246, %v236
    %v248 = vadd.s32 %v247, %v238
    %v249 = vand.u32 %v226, 65535
    %v250 = vshrl.u32 %v226, 16
    %v251 = vand.u32 %v221, 65535
    %v252 = vshrl.u32 %v221, 16
    %v253 = vmul.u32 %v249, %v251
    %v254 = vmul.u32 %v249, %v252
    %v255 = vmul.u32 %v250, %v251
    %v256 = vmul.u32 %v250, %v252
    %v257 = vshll.u32 %v254, 16
    %v258 = vshrl.u32 %v254, 16
    %v259 = vshll.u32 %v255, 16
    %v260 = vshrl.u32 %v255, 16
    %vm261 = vc.u32 %v253, %v257
    %v262 = vsel %vm261, 1, 0
    %v263 = vadd.s32 %v253, %v257
    %v264 = vadd.s32 %v256, %v262
    %vm265 = vc.u32 %v263, %v259
    %v266 = vsel %vm265, 1, 0
    %v267 = vadd.s32 %v263, %v259
    %v268 = vadd.s32 %v264, %v266
    %v269 = vadd.s32 %v268, %v258
    %v270 = vadd.s32 %v269, %v260
    %v271 = vmul.u32 %v226, %v217
    %v272 = vadd.s32 %v248, %v267
    %vm273 = vc.u32 %v248, %v267
    %v274 = vadd.s32 %v270, 1
    %v275 = vsel %vm273, %v274, %v270
    %v276 = vadd.s32 %v271, %v275
    %v277 = vadd.s32 %v276, 536870912
    %v278 = vshrl.u32 %v277, 30
    %v279 = vshll.u32 %v278, 30
    %v280 = vsub.s32 %v276, %v279
    %vm281 = vcmp.lt.s32.totalorder %v280, 0
    %v282 = vsub.s32 0, %v280
    %v283 = vsel %vm281, %v282, %v280
    %v284 = vclz %v283
    %v285 = vsub.s32 %v284, 2
    %vm286 = vcmp.gt.s32.totalorder 0, %v285
    %v287 = vsel %vm286, 0, %v285
    %v288 = vsub.s32 32, %v287
    %v289 = vshll.u32 %v280, %v287
    %v290 = vshrl.u32 %v272, %v288
    %v291 = vor.u32 %v289, %v290
    %v292 = vsub.s32 4294967266, %v287
    %v293 = vadd.s32 %v292, 127
    %v294 = vshll.u32 %v293, 23
    %v295 = vor.u32 4788187, %v294
    %v296 = vand.u32 2147483647, %v295
    %v298 = vcvt.s32.f32 %v291
    %v299 = vmul.f32 %v298, %v296
    %v300 = vxor.u32 %v299, 2147483648
    %v301 = vsel %vm180, %v300, %v299
    %v302 = vsub.s32 4, %v278
    %v303 = vsel %vm180, %v302, %v278
    %v304 = vsel %vm179, %v23, %v301
    %v305 = vsel %vm179, 0, %v303
    %v306 = vmul.f32 %v304, %v304
    %v307 = vmul.f32 %v306, -0.001358992
    %v308 = vadd.f32 %v307, 0.041655596
    %v309 = vmul.f32 %v306, %v308
    %v310 = vadd.f32 %v309, -0.4999988
    %v311 = vmul.f32 %v306, %v310
    %v312 = vadd.f32 1.0, %v311
    %v313 = vmul.f32 %v304, %v304
    %v314 = vmul.f32 %v313, -0.00019511016
    %v315 = vadd.f32 %v314, 0.008332121
    %v316 = vmul.f32 %v313, %v315
    %v317 = vadd.f32 %v316, -0.16666654
    %v318 = vmul.f32 %v313, %v317
    %v319 = vadd.f32 %v318, 1.0
    %v320 = vmul.f32 %v319, %v304
    %vm321 = vweird.f32 %v23
    %v322 = vand.u32 %v305, 3
    %vm323 = vcmp.lt.s32.totalorder %v322, 2
    %vm324 = vcmp.eq.s32.totalorder %v322, 0
    %v325 = vxor.u32 %v320, 2147483648
    %v326 = vsel %vm324, %v312, %v325
    %vm327 = vcmp.eq.s32.totalorder %v322, 2
    %v328 = vxor.u32 %v312, 2147483648
    %v329 = vsel %vm327, %v328, %v320
    %v330 = vsel %vm323, %v326, %v329
    %v331 = vsel %vm321, nan, %v330
    %v332 = vmul.f32 %v14, %v177
    %v333 = vmul.f32 %v15, %v331
    %v334 = vmul.f32 %v12, %v12
    %v335 = vmul.f32 %v13, %v13
    %v336 = vsub.f32 0.0, %v334
    %v337 = vsub.f32 0.0, %v335
    %v338 = vld [vmem:[%s1 + $0x30] sm:$0xff]
    %v339 = vld [vmem:[%s1 + $0x38] sm:$0xff]
    %v340 = vmul.f32 %v336, %v338
    %v341 = vmul.f32 %v337, %v339
    %v342 = vmul.f32 %v340, 1.442695
    %v343 = vpow.pop %v342
    %v344 = vmul.f32 %v341, 1.442695
    %v345 = vpow.pop %v344
    %v346 = vmul.f32 %v332, %v343
    %v347 = vmul.f32 %v333, %v345
    %vm348 = vcmask 130048
    %349 = vst.msk [vmem:[#allocation2] sm:$0xff] %vm348, 0.0
    %350 = vst.msk [vmem:[#allocation2 + $0x8] sm:$0xff] %vm348, 0.0
    %351 = vst.msk [vmem:[#allocation2 + $0x10] sm:$0xff] %vm348, 0.0
    %352 = vst.msk [vmem:[#allocation2 + $0x18] sm:$0xff] %vm348, 0.0
    %v353 = vld [vmem:[%s0] sm:$0xff]
    %v354 = vld [vmem:[%s0 + $0x8] sm:$0xff]
    %vm355 = vcmask 31744
    %356 = vst.msk [vmem:[#allocation2 + $0x1] sm:$0xff] %vm355, %v353
    %vm357 = vcmask 30720
    %358 = vst.msk [vmem:[#allocation2 + $0x9] sm:$0x7f] %vm357, %v354
    %361 = vrot.lane.b32.xlu0 %v353, 4
    %v362 = vpop.permute.xlu0 %361
    %363 = vrot.lane.b32.xlu0 %v354, 4
    %v364 = vpop.permute.xlu0 %363
    %vm367 = vcmask 64544
    %368 = vst.msk [vmem:[#allocation2] sm:$0xff] %vm367, %v362
    %369 = vst.msk [vmem:[#allocation2 + $0x8] sm:$0xff] %vm367, %v364
    %370 = vrot.lane.b32.xlu0 %v353, 8
    %v371 = vpop.permute.xlu0 %370
    %372 = vrot.lane.b32.xlu0 %v354, 8
    %v373 = vpop.permute.xlu0 %372
    %vm376 = vcmask 97345
    %377 = vst.msk [vmem:[#allocation2 - $0x1] sm:$0xfe] %vm376, %v371
    %vm378 = vcmask 97344
    %379 = vst.msk [vmem:[#allocation2 + $0x7] sm:$0xff] %vm378, %v373
    %380 = vrot.lane.b32.xlu0 %v353, 12
    %v381 = vpop.permute.xlu0 %380
    %382 = vrot.lane.b32.xlu0 %v354, 12
    %v383 = vpop.permute.xlu0 %382
    %vm386 = vcmask 130146
    %387 = vst.msk [vmem:[#allocation2 - $0x2] sm:$0xfc] %vm386, %v381
    %vm388 = vcmask 130144
    %389 = vst.msk [vmem:[#allocation2 + $0x6] sm:$0xff] %vm388, %v383
    %s390 = scalar_lea.vmem %s0, 16
    %v391 = vld [vmem:[%s390] sm:$0xff]
    %v392 = vld [vmem:[%s390 + $0x8] sm:$0xff]
    %393 = vst.msk [vmem:[#allocation2 + $0x11] sm:$0xff] %vm355, %v391
    %394 = vst.msk [vmem:[#allocation2 + $0x19] sm:$0x7f] %vm357, %v392
    %397 = vrot.lane.b32.xlu0 %v391, 4
    %v398 = vpop.permute.xlu0 %397
    %399 = vrot.lane.b32.xlu0 %v392, 4
    %v400 = vpop.permute.xlu0 %399
    %403 = vst.msk [vmem:[#allocation2 + $0x10] sm:$0xff] %vm367, %v398
    %404 = vst.msk [vmem:[#allocation2 + $0x18] sm:$0xff] %vm367, %v400
    %405 = vrot.lane.b32.xlu0 %v391, 8
    %v406 = vpop.permute.xlu0 %405
    %407 = vrot.lane.b32.xlu0 %v392, 8
    %v408 = vpop.permute.xlu0 %407
    %411 = vst.msk [vmem:[#allocation2 + $0xf] sm:$0xfe] %vm376, %v406
    %412 = vst.msk [vmem:[#allocation2 + $0x17] sm:$0xff] %vm378, %v408
    %413 = vrot.lane.b32.xlu0 %v391, 12
    %v414 = vpop.permute.xlu0 %413
    %415 = vrot.lane.b32.xlu0 %v392, 12
    %v416 = vpop.permute.xlu0 %415
    %419 = vst.msk [vmem:[#allocation2 + $0xe] sm:$0xfc] %vm386, %v414
    %420 = vst.msk [vmem:[#allocation2 + $0x16] sm:$0xff] %vm388, %v416
    %v421 = vld [vmem:[#allocation2] sm:$0xff]
    %v422 = vld [vmem:[#allocation2 + $0x8] sm:$0xff]
    %v423 = vld [vmem:[#allocation2 + $0x10] sm:$0xff]
    %v424 = vld [vmem:[#allocation2 + $0x18] sm:$0xff]
    %v425 = vld [vmem:[%s1 + $0x70] sm:$0x1]
    %v426 = vperm.slane %v425, 0
    %v428 = vsel %vm348, %v421, 0
    %v431 = vsel %vm348, %v422, 0
    %v434 = vsel %vm348, %v423, 0
    %v437 = vsel %vm348, %v424, 0
    %439 = vmatpush.msra.mxu0 0.0
    %440 = vmatpush.msra.mxu0 0.0
    %441 = vmatpush.msra.mxu0 0.0
    %442 = vmatpush.msra.mxu0 0.0
    %443 = vmatpush.msra.mxu0 0.0
    %444 = vmatpush.msra.mxu0 0.0
    %445 = vmatpush.msra.mxu0 0.0
    %446 = vmatpush.msra.mxu0 0.0
    %447 = vmatpush.msra.mxu0 0.0
    %448 = vmatpush.msra.mxu0 0.0
    %449 = vmatpush.msra.mxu0 0.0
    %450 = vmatpush.msra.mxu0 0.0
    %451 = vmatpush.msra.mxu0 0.0
    %452 = vmatpush.msra.mxu0 0.0
    %453 = vmatpush.msra.mxu0 %v347
    %454 = vmatpush.msra.mxu0 %v346
    %455 = vmatmul.f32.gmra.mxu0 %v428
    %v456 = vpop.f32.mrf.mxu0
    %v457 = vadd.f32 %v426, %v456
    %458 = vmatmul.f32.gmra.mxu0 %v431
    %v459 = vpop.f32.mrf.mxu0
    %v460 = vadd.f32 %v426, %v459
    %461 = vmatmul.f32.gmra.mxu0 %v434
    %v462 = vpop.f32.mrf.mxu0
    %v463 = vadd.f32 %v426, %v462
    %464 = vmatmul.f32.gmra.mxu0 %v437
    %v465 = vpop.f32.mrf.mxu0
    %v466 = vadd.f32 %v426, %v465
    %467 = vdwg.mxu0
    %v468 = vld [vmem:[%s1 + $0x71] sm:$0x1]
    %vm469 = vcmask 59392
    %v470 = vsel %vm469, %v457, -inf
    %v471 = vrot.slane %v470, 4
    %v472 = vmax.f32 %v470, %v471
    %v473 = vrot.slane %v472, 2
    %v474 = vmax.f32 %v472, %v473
    %v475 = vrot.slane %v474, 1
    %v476 = vmax.f32 %v474, %v475
    %v477 = vmax.f32 %v476, 0.0
    %v478 = vld [vmem:[%s1 + $0x50] sm:$0xff]
    %vm479 = vcmask 64512
    %v481 = vsel %vm479, %v477, 0
    %483 = vmatpush.msra.mxu0 0.0
    %484 = vmatpush.msra.mxu0 0.0
    %485 = vmatpush.msra.mxu0 0.0
    %486 = vmatpush.msra.mxu0 0.0
    %487 = vmatpush.msra.mxu0 0.0
    %488 = vmatpush.msra.mxu0 0.0
    %489 = vmatpush.msra.mxu0 0.0
    %490 = vmatpush.msra.mxu0 0.0
    %491 = vmatpush.msra.mxu0 0.0
    %492 = vmatpush.msra.mxu0 0.0
    %493 = vmatpush.msra.mxu0 0.0
    %494 = vmatpush.msra.mxu0 0.0
    %495 = vmatpush.msra.mxu0 0.0
    %496 = vmatpush.msra.mxu0 0.0
    %497 = vmatpush.msra.mxu0 0.0
    %498 = vmatpush.msra.mxu0 %v478
    %499 = vmatmul.f32.gmra.mxu0 %v481
    %v500 = vpop.f32.mrf.mxu0
    %v501 = vadd.f32 0.0, %v500
    %502 = vdwg.mxu0
    %v503 = vadd.f32 %v468, %v501
    %vm504 = vcmask 63491
    %v505 = vsel %vm504, %v457, -inf
    %v506 = vrot.slane %v505, 4
    %v507 = vmax.f32 %v505, %v506
    %v508 = vrot.slane %v507, 2
    %v509 = vmax.f32 %v507, %v508
    %v510 = vrot.slane %v509, 1
    %v511 = vmax.f32 %v509, %v510
    %v512 = vmax.f32 %v511, 0.0
    %v513 = vld [vmem:[%s1 + $0x58] sm:$0xff]
    %v515 = vsel %vm479, %v512, 0
    %517 = vmatpush.msra.mxu0 0.0
    %518 = vmatpush.msra.mxu0 0.0
    %519 = vmatpush.msra.mxu0 0.0
    %520 = vmatpush.msra.mxu0 0.0
    %521 = vmatpush.msra.mxu0 0.0
    %522 = vmatpush.msra.mxu0 0.0
    %523 = vmatpush.msra.mxu0 0.0
    %524 = vmatpush.msra.mxu0 0.0
    %525 = vmatpush.msra.mxu0 0.0
    %526 = vmatpush.msra.mxu0 0.0
    %527 = vmatpush.msra.mxu0 0.0
    %528 = vmatpush.msra.mxu0 0.0
    %529 = vmatpush.msra.mxu0 0.0
    %530 = vmatpush.msra.mxu0 0.0
    %531 = vmatpush.msra.mxu0 0.0
    %532 = vmatpush.msra.mxu0 %v513
    %533 = vmatmul.f32.gmra.mxu0 %v515
    %v534 = vpop.f32.mrf.mxu0
    %v535 = vadd.f32 0.0, %v534
    %536 = vdwg.mxu0
    %v537 = vadd.f32 %v503, %v535
    %vm538 = vcmask 64519
    %v539 = vsel %vm538, %v457, -inf
    %v540 = vsel %vm469, %v460, -inf
    %v541 = vmax.f32 %v539, %v540
    %v542 = vrot.slane %v541, 4
    %v543 = vmax.f32 %v541, %v542
    %v544 = vrot.slane %v543, 2
    %v545 = vmax.f32 %v543, %v544
    %v546 = vrot.slane %v545, 1
    %v547 = vmax.f32 %v545, %v546
    %v548 = vmax.f32 %v547, 0.0
    %v549 = vld [vmem:[%s1 + $0x60] sm:$0xff]
    %v551 = vsel %vm479, %v548, 0
    %553 = vmatpush.msra.mxu0 0.0
    %554 = vmatpush.msra.mxu0 0.0
    %555 = vmatpush.msra.mxu0 0.0
    %556 = vmatpush.msra.mxu0 0.0
    %557 = vmatpush.msra.mxu0 0.0
    %558 = vmatpush.msra.mxu0 0.0
    %559 = vmatpush.msra.mxu0 0.0
    %560 = vmatpush.msra.mxu0 0.0
    %561 = vmatpush.msra.mxu0 0.0
    %562 = vmatpush.msra.mxu0 0.0
    %563 = vmatpush.msra.mxu0 0.0
    %564 = vmatpush.msra.mxu0 0.0
    %565 = vmatpush.msra.mxu0 0.0
    %566 = vmatpush.msra.mxu0 0.0
    %567 = vmatpush.msra.mxu0 0.0
    %568 = vmatpush.msra.mxu0 %v549
    %569 = vmatmul.f32.gmra.mxu0 %v551
    %v570 = vpop.f32.mrf.mxu0
    %v571 = vadd.f32 0.0, %v570
    %572 = vdwg.mxu0
    %v573 = vadd.f32 %v537, %v571
    %v574 = vsel %vm504, %v460, -inf
    %v575 = vrot.slane %v574, 4
    %v576 = vmax.f32 %v574, %v575
    %v577 = vrot.slane %v576, 2
    %v578 = vmax.f32 %v576, %v577
    %v579 = vrot.slane %v578, 1
    %v580 = vmax.f32 %v578, %v579
    %v581 = vmax.f32 %v580, 0.0
    %v582 = vld [vmem:[%s1 + $0x68] sm:$0xff]
    %v584 = vsel %vm479, %v581, 0
    %586 = vmatpush.msra.mxu0 0.0
    %587 = vmatpush.msra.mxu0 0.0
    %588 = vmatpush.msra.mxu0 0.0
    %589 = vmatpush.msra.mxu0 0.0
    %590 = vmatpush.msra.mxu0 0.0
    %591 = vmatpush.msra.mxu0 0.0
    %592 = vmatpush.msra.mxu0 0.0
    %593 = vmatpush.msra.mxu0 0.0
    %594 = vmatpush.msra.mxu0 0.0
    %595 = vmatpush.msra.mxu0 0.0
    %596 = vmatpush.msra.mxu0 0.0
    %597 = vmatpush.msra.mxu0 0.0
    %598 = vmatpush.msra.mxu0 0.0
    %599 = vmatpush.msra.mxu0 0.0
    %600 = vmatpush.msra.mxu0 0.0
    %601 = vmatpush.msra.mxu0 %v582
    %602 = vmatmul.f32.gmra.mxu0 %v584
    %v603 = vpop.f32.mrf.mxu0
    %v604 = vadd.f32 0.0, %v603
    %605 = vdwg.mxu0
    %v606 = vadd.f32 %v573, %v604
    %vm607 = vcmask 57344
    %608 = vst.msk [vmem:[#allocation3] sm:$0x1] %vm607, %v606
    %v609 = vsel %vm469, %v463, -inf
    %v610 = vrot.slane %v609, 4
    %v611 = vmax.f32 %v609, %v610
    %v612 = vrot.slane %v611, 2
    %v613 = vmax.f32 %v611, %v612
    %v614 = vrot.slane %v613, 1
    %v615 = vmax.f32 %v613, %v614
    %v616 = vmax.f32 %v615, 0.0
    %v617 = vld [vmem:[%s1 + $0x50] sm:$0xff]
    %v619 = vsel %vm479, %v616, 0
    %621 = vmatpush.msra.mxu0 0.0
    %622 = vmatpush.msra.mxu0 0.0
    %623 = vmatpush.msra.mxu0 0.0
    %624 = vmatpush.msra.mxu0 0.0
    %625 = vmatpush.msra.mxu0 0.0
    %626 = vmatpush.msra.mxu0 0.0
    %627 = vmatpush.msra.mxu0 0.0
    %628 = vmatpush.msra.mxu0 0.0
    %629 = vmatpush.msra.mxu0 0.0
    %630 = vmatpush.msra.mxu0 0.0
    %631 = vmatpush.msra.mxu0 0.0
    %632 = vmatpush.msra.mxu0 0.0
    %633 = vmatpush.msra.mxu0 0.0
    %634 = vmatpush.msra.mxu0 0.0
    %635 = vmatpush.msra.mxu0 0.0
    %636 = vmatpush.msra.mxu0 %v617
    %637 = vmatmul.f32.gmra.mxu0 %v619
    %v638 = vpop.f32.mrf.mxu0
    %v639 = vadd.f32 0.0, %v638
    %640 = vdwg.mxu0
    %v641 = vadd.f32 %v468, %v639
    %v642 = vsel %vm504, %v463, -inf
    %v643 = vrot.slane %v642, 4
    %v644 = vmax.f32 %v642, %v643
    %v645 = vrot.slane %v644, 2
    %v646 = vmax.f32 %v644, %v645
    %v647 = vrot.slane %v646, 1
    %v648 = vmax.f32 %v646, %v647
    %v649 = vmax.f32 %v648, 0.0
    %v650 = vld [vmem:[%s1 + $0x58] sm:$0xff]
    %v652 = vsel %vm479, %v649, 0
    %654 = vmatpush.msra.mxu0 0.0
    %655 = vmatpush.msra.mxu0 0.0
    %656 = vmatpush.msra.mxu0 0.0
    %657 = vmatpush.msra.mxu0 0.0
    %658 = vmatpush.msra.mxu0 0.0
    %659 = vmatpush.msra.mxu0 0.0
    %660 = vmatpush.msra.mxu0 0.0
    %661 = vmatpush.msra.mxu0 0.0
    %662 = vmatpush.msra.mxu0 0.0
    %663 = vmatpush.msra.mxu0 0.0
    %664 = vmatpush.msra.mxu0 0.0
    %665 = vmatpush.msra.mxu0 0.0
    %666 = vmatpush.msra.mxu0 0.0
    %667 = vmatpush.msra.mxu0 0.0
    %668 = vmatpush.msra.mxu0 0.0
    %669 = vmatpush.msra.mxu0 %v650
    %670 = vmatmul.f32.gmra.mxu0 %v652
    %v671 = vpop.f32.mrf.mxu0
    %v672 = vadd.f32 0.0, %v671
    %673 = vdwg.mxu0
    %v674 = vadd.f32 %v641, %v672
    %v675 = vsel %vm538, %v463, -inf
    %v676 = vsel %vm469, %v466, -inf
    %v677 = vmax.f32 %v675, %v676
    %v678 = vrot.slane %v677, 4
    %v679 = vmax.f32 %v677, %v678
    %v680 = vrot.slane %v679, 2
    %v681 = vmax.f32 %v679, %v680
    %v682 = vrot.slane %v681, 1
    %v683 = vmax.f32 %v681, %v682
    %v684 = vmax.f32 %v683, 0.0
    %v685 = vld [vmem:[%s1 + $0x60] sm:$0xff]
    %v687 = vsel %vm479, %v684, 0
    %689 = vmatpush.msra.mxu0 0.0
    %690 = vmatpush.msra.mxu0 0.0
    %691 = vmatpush.msra.mxu0 0.0
    %692 = vmatpush.msra.mxu0 0.0
    %693 = vmatpush.msra.mxu0 0.0
    %694 = vmatpush.msra.mxu0 0.0
    %695 = vmatpush.msra.mxu0 0.0
    %696 = vmatpush.msra.mxu0 0.0
    %697 = vmatpush.msra.mxu0 0.0
    %698 = vmatpush.msra.mxu0 0.0
    %699 = vmatpush.msra.mxu0 0.0
    %700 = vmatpush.msra.mxu0 0.0
    %701 = vmatpush.msra.mxu0 0.0
    %702 = vmatpush.msra.mxu0 0.0
    %703 = vmatpush.msra.mxu0 0.0
    %704 = vmatpush.msra.mxu0 %v685
    %705 = vmatmul.f32.gmra.mxu0 %v687
    %v706 = vpop.f32.mrf.mxu0
    %v707 = vadd.f32 0.0, %v706
    %708 = vdwg.mxu0
    %v709 = vadd.f32 %v674, %v707
    %v710 = vsel %vm504, %v466, -inf
    %v711 = vrot.slane %v710, 4
    %v712 = vmax.f32 %v710, %v711
    %v713 = vrot.slane %v712, 2
    %v714 = vmax.f32 %v712, %v713
    %v715 = vrot.slane %v714, 1
    %v716 = vmax.f32 %v714, %v715
    %v717 = vmax.f32 %v716, 0.0
    %v718 = vld [vmem:[%s1 + $0x68] sm:$0xff]
    %v720 = vsel %vm479, %v717, 0
    %722 = vmatpush.msra.mxu0 0.0
    %723 = vmatpush.msra.mxu0 0.0
    %724 = vmatpush.msra.mxu0 0.0
    %725 = vmatpush.msra.mxu0 0.0
    %726 = vmatpush.msra.mxu0 0.0
    %727 = vmatpush.msra.mxu0 0.0
    %728 = vmatpush.msra.mxu0 0.0
    %729 = vmatpush.msra.mxu0 0.0
    %730 = vmatpush.msra.mxu0 0.0
    %731 = vmatpush.msra.mxu0 0.0
    %732 = vmatpush.msra.mxu0 0.0
    %733 = vmatpush.msra.mxu0 0.0
    %734 = vmatpush.msra.mxu0 0.0
    %735 = vmatpush.msra.mxu0 0.0
    %736 = vmatpush.msra.mxu0 0.0
    %737 = vmatpush.msra.mxu0 %v718
    %738 = vmatmul.f32.gmra.mxu0 %v720
    %v739 = vpop.f32.mrf.mxu0
    %v740 = vadd.f32 0.0, %v739
    %741 = vdwg.mxu0
    %v742 = vadd.f32 %v709, %v740
    %743 = vst.msk [vmem:[#allocation3 + $0x1] sm:$0x1] %vm607, %v742
    // Predicated region
    $region10: #{tpu_custom_call.1} parent=1 // pred_check
      _
    $region11: #{tpu_custom_call.1} parent=1 // pred_check_branch
      %745 = sbr.rel (0) target = $region13
    $region12: #{tpu_custom_call.1} parent=1 // pred_region
      %747 = vsyncadd [#allocation4], 0
      %s749 = sshll.u32 [#allocation3], 4
      %s750 = int_to_ptr.vmem [resolvable:$true] %s749
      %s751 = sshll.u32 %s2, 4
      %s752 = int_to_ptr.hbm [resolvable:$true] %s751
      %754 = dma.vmem_to_hbm [thread:$0]  %s750, 32, %s752, [#allocation4]
    $region13: #{tpu_custom_call.1} parent=1 // pred_fallthru
      _
    // Predicated region
    $region14: #{tpu_custom_call.1} parent=1 // pred_check
      _
    $region15: #{tpu_custom_call.1} parent=1 // pred_check_branch
      %756 = sbr.rel (0) target = $region17
    $region16: #{tpu_custom_call.1} parent=1 // pred_region
      %758 = dma.done [#allocation4], 32
    $region17: #{tpu_custom_call.1} parent=1 // pred_fallthru
      _
    %759 = vsyncpa [#allocation4], 1

</llo_original>
